<compile_context>
chip_gen: v5e
topology: v5e:2x2
jax: 0.10.0
libtpu: 0.0.40
codegen_flags: <defaults>
</compile_context>

<pallas_src>
import functools

import jax
import jax.numpy as jnp
from jax import lax
from jax.experimental import pallas as pl
from jax.experimental.pallas import tpu as pltpu

LANE = 128
SUBLANE = 8


# ---------------------------------------------------------------------------
# Per-scale sum-of-squared-errors kernel.
#   grid = (nc, tiles_per_core); axis 0 parallel (TensorCores), axis 1 is the
#   serial reduction over row tiles.
#   x_ref, y_ref : (tm, 128) tiles of the lane-dense slab (source dtype)
#   out_ref      : (8, 128) f32 per-core partial accumulator (lane-dense)
# ---------------------------------------------------------------------------
def _sq_err_sum_kernel(x_ref, y_ref, out_ref, *, tm, tpc, rows, needs_mask):
    c = pl.program_id(0)
    t = pl.program_id(1)

    @pl.when(t == 0)
    def _():
        out_ref[...] = jnp.zeros_like(out_ref)

    # Cast to f32 in-kernel (required on v5e anyway); inputs stay narrow in HBM.
    d = x_ref[...].astype(jnp.float32) - y_ref[...].astype(jnp.float32)
    prod = d * d

    if needs_mask:  # compile-time flag: only emitted when a tile can over-reach
        tile = c * tpc + t
        ridx = tile * tm + lax.broadcasted_iota(jnp.int32, (tm, LANE), 0)
        prod = jnp.where(ridx < rows, prod, 0.0)

    # Sublane-grouped VPU add-tree: (tm,128) -> (8,128); keeps the running
    # accumulator at one vreg and avoids any cross-lane work in the hot loop.
    out_ref[...] += jnp.sum(prod.reshape(tm // 8, 8, LANE), axis=0)


def _sum_sq_err(pred, label):
    """sum((pred - label)^2) over all elements of one scale, f32 accumulation."""
    n = pred.size
    x = pred.reshape(-1)
    y = label.reshape(-1)

    min_item = min(x.dtype.itemsize, y.dtype.itemsize)
    max_item = max(x.dtype.itemsize, y.dtype.itemsize)
    sub_mult = SUBLANE * max(1, 4 // min_item)  # 8 f32, 16 bf16, 32 int8/fp8

    # Lane-dense slab in the SOURCE dtype.  Pad only the ragged flat tail (and
    # up to one sublane group for tiny scales); zero padding contributes 0.
    n_pad = max(-(-n // LANE) * LANE, sub_mult * LANE)
    if n_pad != n:
        # TODO(synk): ragged tail -> copies this one scale; large CNN feature
        # maps are normally already a multiple of 128 so this stays a no-op.
        x = jnp.pad(x, (0, n_pad - n))
        y = jnp.pad(y, (0, n_pad - n))
    rows = n_pad // LANE
    x = x.reshape(rows, LANE)
    y = y.reshape(rows, LANE)

    # Row-tile size: ~1 MiB blocks (85%+ of HBM roofline), multiple of the
    # packed sublane group, and small enough to leave >=4 grid steps when the
    # scale is large enough to pipeline.
    target = max(sub_mult, ((1 << 20) // (LANE * max_item)) // sub_mult * sub_mult)
    quarter = -(-(-(-rows // 4)) // sub_mult) * sub_mult
    tm = min(target, max(sub_mult, quarter))

    num_tiles = -(-rows // tm)
    nc = 2 if num_tiles >= 8 else 1          # v7x: split tiles across 2 TCs
    tpc = -(-num_tiles // nc)
    needs_mask = (nc * tpc * tm != rows)     # any tile over-reaches the slab?
    last_tile = num_tiles - 1

    def in_map(c, t):
        # Clamp so we never ask for a block past the array; over-reaching
        # logical tiles are zeroed by the in-kernel row mask instead.
        return (jnp.minimum(c * tpc + t, last_tile), 0)

    kernel = functools.partial(
        _sq_err_sum_kernel, tm=tm, tpc=tpc, rows=rows, needs_mask=needs_mask)

    out = pl.pallas_call(
        kernel,
        out_shape=jax.ShapeDtypeStruct((nc * SUBLANE, LANE), jnp.float32),
        grid_spec=pltpu.PrefetchScalarGridSpec(
            num_scalar_prefetch=0,
            grid=(nc, tpc),
            in_specs=[
                pl.BlockSpec((tm, LANE), in_map),
                pl.BlockSpec((tm, LANE), in_map),
            ],
            out_specs=pl.BlockSpec((SUBLANE, LANE), lambda c, t: (c, 0)),
        ),
        compiler_params=pltpu.CompilerParams(
            dimension_semantics=("parallel", "arbitrary"),
        ),
    )(x, y)

    # Final tiny cross-lane/sublane reduce of the per-core partial blocks.
    return jnp.sum(out)


# ---------------------------------------------------------------------------
# MultiScaleCriterion.forward equivalent.
# ---------------------------------------------------------------------------
def multi_scale_criterion(predicted, label, scale_weights):
    # global_data_filter is None -> passthrough (module skips it).
    total = jnp.zeros((), jnp.float32)
    for index in range(len(predicted)):
        # scale_dispatcher(predicted, label, index): select this scale's pair.
        p_s, l_s = predicted[index], label[index]
        # single_scale_criterion[index] (MSE) = sum(diff^2) / numel.
        mse = _sum_sq_err(p_s, l_s) / float(p_s.size)
        # multi_scale_loss_composer: weighted sum of per-scale losses.
        total = total + scale_weights[index].astype(jnp.float32) * mse
    return total


# Pure-JAX reference for a correctness check.
def _reference(predicted, label, scale_weights):
    total = 0.0
    for i in range(len(predicted)):
        d = predicted[i].astype(jnp.float32) - label[i].astype(jnp.float32)
        total = total + scale_weights[i] * jnp.mean(d * d)
    return total


if __name__ == "__main__":
    key = jax.random.PRNGKey(0)
    B, C = 2, 4
    spatials = [16, 8, 4]  # three scales

    predicted, label = [], []
    for s in spatials:
        key, k1, k2 = jax.random.split(key, 3)
        predicted.append(jax.random.normal(k1, (B, C, s, s), dtype=jnp.float32))
        label.append(jax.random.normal(k2, (B, C, s, s), dtype=jnp.float32))

    # Deterministic composer "parameters": per-scale loss weights.
    scale_weights = jnp.array([1.0, 0.5, 0.25], dtype=jnp.float32)

    fn = jax.jit(multi_scale_criterion)  # fuse the (free) reshapes with the calls
    out = jax.block_until_ready(fn(predicted, label, scale_weights))

    ref = _reference(predicted, label, scale_weights)
    assert jnp.allclose(out, ref, rtol=1e-5, atol=1e-5), (out, ref)

    print("KERNEL_OK")
</pallas_src>

<mosaic_0001>
module attributes {stable_mosaic.version = 11 : i64} {
  func.func @_sq_err_sum_kernel(%arg0: i32, %arg1: i32, %arg2: memref<8x128xf32, #tpu.memory_space<vmem>>, %arg3: memref<8x128xf32, #tpu.memory_space<vmem>>, %arg4: memref<8x128xf32, #tpu.memory_space<vmem>>) attributes {dimension_semantics = [#tpu.dimension_semantics<parallel>, #tpu.dimension_semantics<arbitrary>], iteration_bounds = array<i64: 1, 1>, scalar_prefetch = 0 : i64, scratch_operands = 0 : i64, tpu.core_type = #tpu.core_type<tc>, window_params = [{transform_indices = @transform_0, window_bounds = array<i64: 8, 128>}, {transform_indices = @transform_1, window_bounds = array<i64: 8, 128>}, {transform_indices = @transform_2, window_bounds = array<i64: 8, 128>}]} {
    %c0_i32 = arith.constant 0 : i32
    %0 = arith.cmpi eq, %arg1, %c0_i32 : i32
    %1 = arith.extui %0 : i1 to i32
    %c0_i32_0 = arith.constant 0 : i32
    %2 = arith.cmpi ne, %1, %c0_i32_0 : i32
    scf.if %2 {
      %cst_8 = arith.constant 0.000000e+00 : f32
      %12 = vector.broadcast %cst_8 : f32 to vector<8x128xf32>
      %c0_9 = arith.constant 0 : index
      %c0_10 = arith.constant 0 : index
      %13 = vector.load %arg4[%c0_9, %c0_10] : memref<8x128xf32, #tpu.memory_space<vmem>>, vector<8x128xf32>
      tpu.vector_store %arg4[%c0_9, %c0_10], %12 {strides = array<i32>} : memref<8x128xf32, #tpu.memory_space<vmem>>, vector<8x128xf32>,
    } else {
    }
    %c0 = arith.constant 0 : index
    %c0_1 = arith.constant 0 : index
    %3 = vector.load %arg2[%c0, %c0_1] : memref<8x128xf32, #tpu.memory_space<vmem>>, vector<8x128xf32>
    %c0_2 = arith.constant 0 : index
    %c0_3 = arith.constant 0 : index
    %4 = vector.load %arg3[%c0_2, %c0_3] : memref<8x128xf32, #tpu.memory_space<vmem>>, vector<8x128xf32>
    %5 = arith.subf %3, %4 : vector<8x128xf32>
    %6 = arith.mulf %5, %5 : vector<8x128xf32>
    %c0_4 = arith.constant 0 : index
    %c0_5 = arith.constant 0 : index
    %7 = vector.load %arg4[%c0_4, %c0_5] : memref<8x128xf32, #tpu.memory_space<vmem>>, vector<8x128xf32>
    %8 = vector.shape_cast %6 : vector<8x128xf32> to vector<1x8x128xf32>
    %cst = arith.constant dense<0.000000e+00> : vector<8x128xf32>
    %9 = vector.multi_reduction <add>, %8, %cst [0] : vector<1x8x128xf32> to vector<8x128xf32>
    %10 = arith.addf %7, %9 : vector<8x128xf32>
    %c0_6 = arith.constant 0 : index
    %c0_7 = arith.constant 0 : index
    %11 = vector.load %arg4[%c0_6, %c0_7] : memref<8x128xf32, #tpu.memory_space<vmem>>, vector<8x128xf32>
    tpu.vector_store %arg4[%c0_6, %c0_7], %10 {strides = array<i32>} : memref<8x128xf32, #tpu.memory_space<vmem>>, vector<8x128xf32>,
    return
  }
  func.func @transform_0(%arg0: i32, %arg1: i32) -> (i32, i32) {
    %c1_i32 = arith.constant 1 : i32
    %0 = arith.muli %arg0, %c1_i32 : i32
    %1 = arith.addi %0, %arg1 : i32
    %c0_i32 = arith.constant 0 : i32
    %2 = arith.minsi %1, %c0_i32 : i32
    %c0_i32_0 = arith.constant 0 : i32
    %c0_i32_1 = arith.constant 0 : i32
    return %2, %c0_i32_0 : i32, i32
  }
  func.func @transform_1(%arg0: i32, %arg1: i32) -> (i32, i32) {
    %c1_i32 = arith.constant 1 : i32
    %0 = arith.muli %arg0, %c1_i32 : i32
    %1 = arith.addi %0, %arg1 : i32
    %c0_i32 = arith.constant 0 : i32
    %2 = arith.minsi %1, %c0_i32 : i32
    %c0_i32_0 = arith.constant 0 : i32
    %c0_i32_1 = arith.constant 0 : i32
    return %2, %c0_i32_0 : i32, i32
  }
  func.func @transform_2(%arg0: i32, %arg1: i32) -> (i32, i32) {
    %c0_i32 = arith.constant 0 : i32
    %c0_i32_0 = arith.constant 0 : i32
    return %arg0, %c0_i32 : i32, i32
  }
}

module attributes {stable_mosaic.version = 11 : i64} {
  func.func @_sq_err_sum_kernel(%arg0: i32, %arg1: i32, %arg2: memref<8x128xf32, #tpu.memory_space<vmem>>, %arg3: memref<8x128xf32, #tpu.memory_space<vmem>>, %arg4: memref<8x128xf32, #tpu.memory_space<vmem>>) attributes {dimension_semantics = [#tpu.dimension_semantics<parallel>, #tpu.dimension_semantics<arbitrary>], iteration_bounds = array<i64: 1, 2>, scalar_prefetch = 0 : i64, scratch_operands = 0 : i64, tpu.core_type = #tpu.core_type<tc>, window_params = [{transform_indices = @transform_0, window_bounds = array<i64: 8, 128>}, {transform_indices = @transform_1, window_bounds = array<i64: 8, 128>}, {transform_indices = @transform_2, window_bounds = array<i64: 8, 128>}]} {
    %c0_i32 = arith.constant 0 : i32
    %0 = arith.cmpi eq, %arg1, %c0_i32 : i32
    %1 = arith.extui %0 : i1 to i32
    %c0_i32_0 = arith.constant 0 : i32
    %2 = arith.cmpi ne, %1, %c0_i32_0 : i32
    scf.if %2 {
      %cst_8 = arith.constant 0.000000e+00 : f32
      %12 = vector.broadcast %cst_8 : f32 to vector<8x128xf32>
      %c0_9 = arith.constant 0 : index
      %c0_10 = arith.constant 0 : index
      %13 = vector.load %arg4[%c0_9, %c0_10] : memref<8x128xf32, #tpu.memory_space<vmem>>, vector<8x128xf32>
      tpu.vector_store %arg4[%c0_9, %c0_10], %12 {strides = array<i32>} : memref<8x128xf32, #tpu.memory_space<vmem>>, vector<8x128xf32>,
    } else {
    }
    %c0 = arith.constant 0 : index
    %c0_1 = arith.constant 0 : index
    %3 = vector.load %arg2[%c0, %c0_1] : memref<8x128xf32, #tpu.memory_space<vmem>>, vector<8x128xf32>
    %c0_2 = arith.constant 0 : index
    %c0_3 = arith.constant 0 : index
    %4 = vector.load %arg3[%c0_2, %c0_3] : memref<8x128xf32, #tpu.memory_space<vmem>>, vector<8x128xf32>
    %5 = arith.subf %3, %4 : vector<8x128xf32>
    %6 = arith.mulf %5, %5 : vector<8x128xf32>
    %c0_4 = arith.constant 0 : index
    %c0_5 = arith.constant 0 : index
    %7 = vector.load %arg4[%c0_4, %c0_5] : memref<8x128xf32, #tpu.memory_space<vmem>>, vector<8x128xf32>
    %8 = vector.shape_cast %6 : vector<8x128xf32> to vector<1x8x128xf32>
    %cst = arith.constant dense<0.000000e+00> : vector<8x128xf32>
    %9 = vector.multi_reduction <add>, %8, %cst [0] : vector<1x8x128xf32> to vector<8x128xf32>
    %10 = arith.addf %7, %9 : vector<8x128xf32>
    %c0_6 = arith.constant 0 : index
    %c0_7 = arith.constant 0 : index
    %11 = vector.load %arg4[%c0_6, %c0_7] : memref<8x128xf32, #tpu.memory_space<vmem>>, vector<8x128xf32>
    tpu.vector_store %arg4[%c0_6, %c0_7], %10 {strides = array<i32>} : memref<8x128xf32, #tpu.memory_space<vmem>>, vector<8x128xf32>,
    return
  }
  func.func @transform_0(%arg0: i32, %arg1: i32) -> (i32, i32) {
    %c2_i32 = arith.constant 2 : i32
    %0 = arith.muli %arg0, %c2_i32 : i32
    %1 = arith.addi %0, %arg1 : i32
    %c1_i32 = arith.constant 1 : i32
    %2 = arith.minsi %1, %c1_i32 : i32
    %c0_i32 = arith.constant 0 : i32
    %c0_i32_0 = arith.constant 0 : i32
    return %2, %c0_i32 : i32, i32
  }
  func.func @transform_1(%arg0: i32, %arg1: i32) -> (i32, i32) {
    %c2_i32 = arith.constant 2 : i32
    %0 = arith.muli %arg0, %c2_i32 : i32
    %1 = arith.addi %0, %arg1 : i32
    %c1_i32 = arith.constant 1 : i32
    %2 = arith.minsi %1, %c1_i32 : i32
    %c0_i32 = arith.constant 0 : i32
    %c0_i32_0 = arith.constant 0 : i32
    return %2, %c0_i32 : i32, i32
  }
  func.func @transform_2(%arg0: i32, %arg1: i32) -> (i32, i32) {
    %c0_i32 = arith.constant 0 : i32
    %c0_i32_0 = arith.constant 0 : i32
    return %arg0, %c0_i32 : i32, i32
  }
}

</mosaic_0001>

<llo_original>
// kernel: multi_scale_criterion.4
$region0: #{multi_scale_criterion.4}
  #allocation0 [shape = 'u32[]', space=smem, size = 0x4, offset = 0x4, fixed_abs, tag = 'smem constant byte address 0x4 - core index']
  #allocation1 [shape = 'u32[72,128]{1,0:T(1,128)}', space=vmem, size = 0x9000, scoped, tag = 'internal scratch']
  %s0 = inlined_call_operand.vmem [shape: f32[8,128], index: 0, kind: input, shape index: {}]
  %s1 = inlined_call_operand.vmem [shape: f32[8,128], index: 1, kind: input, shape index: {}]
  %s2 = inlined_call_operand.vmem [shape: f32[8,128], index: 2, kind: output, shape index: {}]
  %s3 = sld [smem:[#allocation0]]
  $region22: #{multi_scale_criterion.4} parent=0
    _
  %s5 = ssub.s32 1, %s3
  %s6 = scalar_select 0, %s5, %s3
  // Predicated region
  $region2: #{multi_scale_criterion.4} parent=0 // pred_check
    _
  $region3: #{multi_scale_criterion.4} parent=0 // pred_check_branch
    %8 = sbr.rel (0) target = $region5
  $region4: #{multi_scale_criterion.4} parent=0 // pred_region
    %s9 = sadd.s32 0, 0
    %p10 = scmp.lt.s32.totalorder %s9, 0
    %s11 = scalar_select %p10, %s9, 0
    %p12 = scmp.lt.s32.totalorder %s11, 0
    %s13 = scalar_select %p12, %s11, 0
    %s14 = smul.addr %s13, 8
    %s15 = scalar_lea.vmem %s0, %s14
    %s16 = sadd.s32 0, 0
    %p17 = scmp.lt.s32.totalorder %s16, 0
    %s18 = scalar_select %p17, %s16, 0
  $region5: #{multi_scale_criterion.4} parent=0 // pred_fallthru
    _
  // Predicated region
  $region6: #{multi_scale_criterion.4} parent=0 // pred_check
    _
  $region7: #{multi_scale_criterion.4} parent=0 // pred_check_branch
    %20 = sbr.rel (0) target = $region9
  $region8: #{multi_scale_criterion.4} parent=0 // pred_region
    %s21 = sadd.s32 0, 0
    %p22 = scmp.lt.s32.totalorder %s21, 0
    %s23 = scalar_select %p22, %s21, 0
    %p24 = scmp.lt.s32.totalorder %s23, 0
    %s25 = scalar_select %p24, %s23, 0
    %s26 = smul.addr %s25, 8
    %s27 = scalar_lea.vmem %s1, %s26
    %s28 = sadd.s32 0, 0
    %p29 = scmp.lt.s32.totalorder %s28, 0
    %s30 = scalar_select %p29, %s28, 0
  $region9: #{multi_scale_criterion.4} parent=0 // pred_fallthru
    _
  %s31 = sadd.s32 0, 0
  %p32 = scmp.lt.s32.totalorder %s31, 0
  %s33 = scalar_select %p32, %s31, 0
  %p34 = scmp.lt.s32.totalorder %s33, 0
  %s35 = scalar_select %p34, %s33, 0
  %s36 = smul.addr %s35, 8
  %s37 = scalar_lea.vmem %s0, %s36
  %s38 = sadd.s32 0, 0
  %p39 = scmp.lt.s32.totalorder %s38, 0
  %s40 = scalar_select %p39, %s38, 0
  %p41 = scmp.lt.s32.totalorder %s40, 0
  %s42 = scalar_select %p41, %s40, 0
  %s43 = smul.addr %s42, 8
  %s44 = scalar_lea.vmem %s1, %s43
  %s45 = sadd.s32 0, 0
  %p46 = scmp.lt.s32.totalorder %s45, 0
  %s47 = scalar_select %p46, %s45, 0
  %p48 = scmp.lt.s32.totalorder %s47, 0
  %s49 = scalar_select %p48, %s47, 0
  %s50 = smul.addr %s49, 8
  %s51 = scalar_lea.vmem %s0, %s50
  %s52 = sadd.s32 0, 0
  %p53 = scmp.lt.s32.totalorder %s52, 0
  %s54 = scalar_select %p53, %s52, 0
  %s55 = sadd.s32 0, 0
  %p56 = scmp.lt.s32.totalorder %s55, 0
  %s57 = scalar_select %p56, %s55, 0
  %p58 = scmp.lt.s32.totalorder %s57, 0
  %s59 = scalar_select %p58, %s57, 0
  %s60 = smul.addr %s59, 8
  %s61 = scalar_lea.vmem %s1, %s60
  %s62 = sadd.s32 0, 0
  %p63 = scmp.lt.s32.totalorder %s62, 0
  %s64 = scalar_select %p63, %s62, 0
  %p65 = scmp.eq.s32.totalorder 0, 0
  // Predicated region
  $region10: #{multi_scale_criterion.4} parent=0 // pred_check
    %p66 = pneg %p65
  $region11: #{multi_scale_criterion.4} parent=0 // pred_check_branch
    %68 = sbr.rel (%p66) target = $region13
  $region12: #{multi_scale_criterion.4} parent=0 // pred_region
    %69 = vst [vmem:[%s2] sm:$0xff] 0.0
  $region13: #{multi_scale_criterion.4} parent=0 // pred_fallthru
    _
  %v70 = vld [vmem:[%s51] sm:$0xff]
  %v71 = vld [vmem:[%s61] sm:$0xff]
  %v72 = vsub.f32 %v70, %v71
  %v73 = vmul.f32 %v72, %v72
  %v74 = vld [vmem:[%s2] sm:$0xff]
  %v75 = vadd.f32 %v73, 0.0
  %v76 = vadd.f32 %v74, %v75
  %77 = vst [vmem:[%s2] sm:$0xff] %v76
  // Predicated region
  $region14: #{multi_scale_criterion.4} parent=0 // pred_check
    _
  $region15: #{multi_scale_criterion.4} parent=0 // pred_check_branch
    %79 = sbr.rel (0) target = $region17
  $region16: #{multi_scale_criterion.4} parent=0 // pred_region
    _
  $region17: #{multi_scale_criterion.4} parent=0 // pred_fallthru
    _
  // Predicated region
  $region18: #{multi_scale_criterion.4} parent=0 // pred_check
    _
  $region19: #{multi_scale_criterion.4} parent=0 // pred_check_branch
    %81 = sbr.rel (0) target = $region21
  $region20: #{multi_scale_criterion.4} parent=0 // pred_region
    _
  $region21: #{multi_scale_criterion.4} parent=0 // pred_fallthru
    _

// kernel: multi_scale_criterion.3
$region0: #{multi_scale_criterion.3}
  #allocation0 [shape = 'u32[]', space=smem, size = 0x4, offset = 0x4, fixed_abs, tag = 'smem constant byte address 0x4 - core index']
  #allocation1 [shape = 'u32[72,128]{1,0:T(1,128)}', space=vmem, size = 0x9000, scoped, tag = 'internal scratch']
  %s0 = inlined_call_operand.vmem [shape: f32[16,128], index: 0, kind: input, shape index: {}]
  %s1 = inlined_call_operand.vmem [shape: f32[16,128], index: 1, kind: input, shape index: {}]
  %s2 = inlined_call_operand.vmem [shape: f32[8,128], index: 2, kind: output, shape index: {}]
  %s3 = sld [smem:[#allocation0]]
  $region45: #{multi_scale_criterion.3} parent=0
    _
  %s5 = ssub.s32 1, %s3
  %s6 = scalar_select 0, %s5, %s3
  loop: start=0, step=1, limit=4
  $region2: #{multi_scale_criterion.3} parent=0 // loop_pre_header
    _
  $region3: #{multi_scale_criterion.3} parent=0 // loop_header
    %s8 = sphi 0, %s12
    %p9 = scmp.ge.s32.totalorder %s8, 4
    %s15 = sphi 0, %s27
    %s16 = sphi 0, %s23
    %s17 = sphi 0, %s15
    %s18 = sphi 0, %s16
    %s19 = sphi 0, %s17
    %s20 = sphi 0, %s18
    %s38 = sphi 0, %s40
    %s41 = sphi 0, %s38
    %s42 = sphi 0, %s41
    %s58 = sphi 0, %s42
    %s72 = sphi 0, %s74
    %s75 = sphi 0, %s72
    %s76 = sphi 0, %s75
    %s92 = sphi 0, %s76
    %s98 = sphi 0, %s100
    %s101 = sphi 0, %s98
    %s102 = sphi 0, %s101
    %s118 = sphi 0, %s102
  $region4: #{multi_scale_criterion.3} parent=0 // loop_header_branch
    %11 = sbr.rel (%p9) target = $region8
  $region5: #{multi_scale_criterion.3} parent=0 // loop_body
    %s13 = ssub.s32 %s8, 1
    %s14 = ssub.s32 %s8, 2
    %s21 = sadd.s32 1, %s16
    %p22 = scmp.ge.s32.totalorder %s21, 2
    %s23 = scalar_select %p22, 0, %s21
    %s24 = sadd.s32 1, %s15
    %s25 = scalar_select %p22, %s24, %s15
    %p26 = scmp.ge.s32.totalorder %s25, 1
    %s27 = scalar_select %p26, 0, %s25
    %s28 = smul.u32 %s15, 2
    %s29 = sadd.s32 %s28, %s16
    %p30 = scmp.lt.s32.totalorder %s29, 1
    %s31 = scalar_select %p30, %s29, 1
    %s32 = smul.u32 %s27, 2
    %s33 = sadd.s32 %s32, %s23
    %p34 = scmp.lt.s32.totalorder %s33, 1
    %s35 = scalar_select %p34, %s33, 1
    %s36 = ssub.s32 %s31, %s35
    %p37 = scmp.eq.s32.totalorder %s36, 0
    %s39 = sadd.s32 %s38, 1
    %s40 = scalar_select %p37, %s38, %s39
    %p43 = pneg %p37
    %p44 = scmp.eq.s32.totalorder %s8, 1
    %p45 = por %p43, %p44
    %p46 = scmp.ne.s32.totalorder %s38, %s41
    %p47 = scmp.eq.s32.totalorder %s8, 0
    %p48 = por %p46, %p47
    %p49 = scmp.ne.s32.totalorder %s38, %s41
    %p50 = scmp.eq.s32.totalorder %s13, 1
    %p51 = por %p49, %p50
    %p52 = scmp.ne.s32.totalorder %s41, %s42
    %p53 = scmp.eq.s32.totalorder %s13, 0
    %p54 = por %p52, %p53
    %p55 = scmp.ne.s32.totalorder %s41, %s42
    %p56 = scmp.eq.s32.totalorder %s14, 1
    %p57 = por %p55, %p56
    %p59 = scmp.ne.s32.totalorder %s42, %s58
    %p60 = scmp.eq.s32.totalorder %s14, 0
    %p61 = por %p59, %p60
    %s62 = smul.u32 %s15, 2
    %s63 = sadd.s32 %s62, %s16
    %p64 = scmp.lt.s32.totalorder %s63, 1
    %s65 = scalar_select %p64, %s63, 1
    %s66 = smul.u32 %s27, 2
    %s67 = sadd.s32 %s66, %s23
    %p68 = scmp.lt.s32.totalorder %s67, 1
    %s69 = scalar_select %p68, %s67, 1
    %s70 = ssub.s32 %s65, %s69
    %p71 = scmp.eq.s32.totalorder %s70, 0
    %s73 = sadd.s32 %s72, 1
    %s74 = scalar_select %p71, %s72, %s73
    %p77 = pneg %p71
    %p78 = scmp.eq.s32.totalorder %s8, 1
    %p79 = por %p77, %p78
    %p80 = scmp.ne.s32.totalorder %s72, %s75
    %p81 = scmp.eq.s32.totalorder %s8, 0
    %p82 = por %p80, %p81
    %p83 = scmp.ne.s32.totalorder %s72, %s75
    %p84 = scmp.eq.s32.totalorder %s13, 1
    %p85 = por %p83, %p84
    %p86 = scmp.ne.s32.totalorder %s75, %s76
    %p87 = scmp.eq.s32.totalorder %s13, 0
    %p88 = por %p86, %p87
    %p89 = scmp.ne.s32.totalorder %s75, %s76
    %p90 = scmp.eq.s32.totalorder %s14, 1
    %p91 = por %p89, %p90
    %p93 = scmp.ne.s32.totalorder %s76, %s92
    %p94 = scmp.eq.s32.totalorder %s14, 0
    %p95 = por %p93, %p94
    %s96 = ssub.s32 %s15, %s27
    %p97 = scmp.eq.s32.totalorder %s96, 0
    %s99 = sadd.s32 %s98, 1
    %s100 = scalar_select %p97, %s98, %s99
    %p103 = pneg %p97
    %p104 = scmp.eq.s32.totalorder %s8, 1
    %p105 = por %p103, %p104
    %p106 = scmp.ne.s32.totalorder %s98, %s101
    %p107 = scmp.eq.s32.totalorder %s8, 0
    %p108 = por %p106, %p107
    %p109 = scmp.ne.s32.totalorder %s98, %s101
    %p110 = scmp.eq.s32.totalorder %s13, 1
    %p111 = por %p109, %p110
    %p112 = scmp.ne.s32.totalorder %s101, %s102
    %p113 = scmp.eq.s32.totalorder %s13, 0
    %p114 = por %p112, %p113
    %p115 = scmp.ne.s32.totalorder %s101, %s102
    %p116 = scmp.eq.s32.totalorder %s14, 1
    %p117 = por %p115, %p116
    %p119 = scmp.ne.s32.totalorder %s102, %s118
    %p120 = scmp.eq.s32.totalorder %s14, 0
    %p121 = por %p119, %p120
    %p122 = scmp.le.s32.totalorder 1, %s8
    %p123 = scmp.lt.s32.totalorder %s8, 3
    %p124 = pnand %p122, %p123
    %p125 = pneg %p124
    // Predicated region
    $region9: #{multi_scale_criterion.3} parent=5 // pred_check
      _
    $region10: #{multi_scale_criterion.3} parent=5 // pred_check_branch
      %127 = sbr.rel (%p124) target = $region12
    $region11: #{multi_scale_criterion.3} parent=5 // pred_region
      %s128 = ssub.s32 %s8, 1
    $region12: #{multi_scale_criterion.3} parent=5 // pred_fallthru
      _
    %p129 = scmp.lt.s32.totalorder %s8, 2
    // Predicated region
    $region13: #{multi_scale_criterion.3} parent=5 // pred_check
      %p130 = pneg %p129
    $region14: #{multi_scale_criterion.3} parent=5 // pred_check_branch
      %132 = sbr.rel (%p130) target = $region16
    $region15: #{multi_scale_criterion.3} parent=5 // pred_region
      // Predicated region
      $region17: #{multi_scale_criterion.3} parent=15 // pred_check
        %p133 = pneg %p48
      $region18: #{multi_scale_criterion.3} parent=15 // pred_check_branch
        %135 = sbr.rel (%p133) target = $region20
      $region19: #{multi_scale_criterion.3} parent=15 // pred_region
        %s136 = smul.u32 %s15, 2
        %s137 = sadd.s32 %s136, %s16
        %p138 = scmp.lt.s32.totalorder %s137, 1
        %s139 = scalar_select %p138, %s137, 1
        %p140 = scmp.lt.s32.totalorder %s139, 1
        %s141 = scalar_select %p140, %s139, 1
        %s142 = smul.addr %s141, 8
        %s143 = scalar_lea.vmem %s0, %s142
        %s144 = smul.u32 %s15, 2
        %s145 = sadd.s32 %s144, %s16
        %p146 = scmp.lt.s32.totalorder %s145, 1
        %s147 = scalar_select %p146, %s145, 1
      $region20: #{multi_scale_criterion.3} parent=15 // pred_fallthru
        _
      // Predicated region
      $region21: #{multi_scale_criterion.3} parent=15 // pred_check
        %p148 = pneg %p82
      $region22: #{multi_scale_criterion.3} parent=15 // pred_check_branch
        %150 = sbr.rel (%p148) target = $region24
      $region23: #{multi_scale_criterion.3} parent=15 // pred_region
        %s151 = smul.u32 %s15, 2
        %s152 = sadd.s32 %s151, %s16
        %p153 = scmp.lt.s32.totalorder %s152, 1
        %s154 = scalar_select %p153, %s152, 1
        %p155 = scmp.lt.s32.totalorder %s154, 1
        %s156 = scalar_select %p155, %s154, 1
        %s157 = smul.addr %s156, 8
        %s158 = scalar_lea.vmem %s1, %s157
        %s159 = smul.u32 %s15, 2
        %s160 = sadd.s32 %s159, %s16
        %p161 = scmp.lt.s32.totalorder %s160, 1
        %s162 = scalar_select %p161, %s160, 1
      $region24: #{multi_scale_criterion.3} parent=15 // pred_fallthru
        _
    $region16: #{multi_scale_criterion.3} parent=5 // pred_fallthru
      _
    %p163 = scmp.le.s32.totalorder 1, %s8
    %p164 = scmp.lt.s32.totalorder %s8, 3
    %p165 = pnand %p163, %p164
    %p166 = pneg %p165
    // Predicated region
    $region25: #{multi_scale_criterion.3} parent=5 // pred_check
      _
    $region26: #{multi_scale_criterion.3} parent=5 // pred_check_branch
      %168 = sbr.rel (%p165) target = $region28
    $region27: #{multi_scale_criterion.3} parent=5 // pred_region
      %s169 = ssub.s32 %s8, 1
      %s170 = smul.u32 %s17, 2
      %s171 = sadd.s32 %s170, %s18
      %p172 = scmp.lt.s32.totalorder %s171, 1
      %s173 = scalar_select %p172, %s171, 1
      %p174 = scmp.lt.s32.totalorder %s173, 1
      %s175 = scalar_select %p174, %s173, 1
      %s176 = smul.addr %s175, 8
      %s177 = scalar_lea.vmem %s0, %s176
      %p178 = pneg %p54
      %p179 = pneg %p51
      %s180 = smul.u32 %s17, 2
      %s181 = sadd.s32 %s180, %s18
      %p182 = scmp.lt.s32.totalorder %s181, 1
      %s183 = scalar_select %p182, %s181, 1
      %p184 = scmp.lt.s32.totalorder %s183, 1
      %s185 = scalar_select %p184, %s183, 1
      %s186 = smul.addr %s185, 8
      %s187 = scalar_lea.vmem %s1, %s186
      %p188 = pneg %p88
      %p189 = pneg %p85
      %p190 = pneg %p114
      %p191 = pneg %p111
      %p192 = scmp.lt.s32.totalorder %s17, 0
      %s193 = scalar_select %p192, %s17, 0
      %s194 = smul.addr %s193, 8
      %s195 = scalar_lea.vmem %s2, %s194
      %s196 = smul.u32 %s17, 2
      %s197 = sadd.s32 %s196, %s18
      %p198 = scmp.lt.s32.totalorder %s197, 1
      %s199 = scalar_select %p198, %s197, 1
      %p200 = scmp.lt.s32.totalorder %s199, 1
      %s201 = scalar_select %p200, %s199, 1
      %s202 = smul.addr %s201, 8
      %s203 = scalar_lea.vmem %s0, %s202
      %s204 = smul.u32 %s17, 2
      %s205 = sadd.s32 %s204, %s18
      %p206 = scmp.lt.s32.totalorder %s205, 1
      %s207 = scalar_select %p206, %s205, 1
      %s208 = smul.u32 %s17, 2
      %s209 = sadd.s32 %s208, %s18
      %p210 = scmp.lt.s32.totalorder %s209, 1
      %s211 = scalar_select %p210, %s209, 1
      %p212 = scmp.lt.s32.totalorder %s211, 1
      %s213 = scalar_select %p212, %s211, 1
      %s214 = smul.addr %s213, 8
      %s215 = scalar_lea.vmem %s1, %s214
      %s216 = smul.u32 %s17, 2
      %s217 = sadd.s32 %s216, %s18
      %p218 = scmp.lt.s32.totalorder %s217, 1
      %s219 = scalar_select %p218, %s217, 1
      %p220 = scmp.lt.s32.totalorder %s17, 0
      %s221 = scalar_select %p220, %s17, 0
      %s222 = smul.addr %s221, 8
      %s223 = scalar_lea.vmem %s2, %s222
      %p224 = scmp.eq.s32.totalorder %s18, 0
      // Predicated region
      $region29: #{multi_scale_criterion.3} parent=27 // pred_check
        %p225 = pneg %p224
      $region30: #{multi_scale_criterion.3} parent=27 // pred_check_branch
        %227 = sbr.rel (%p225) target = $region32
      $region31: #{multi_scale_criterion.3} parent=27 // pred_region
        %228 = vst [vmem:[%s223] sm:$0xff] 0.0
      $region32: #{multi_scale_criterion.3} parent=27 // pred_fallthru
        _
      %v229 = vld [vmem:[%s203] sm:$0xff]
      %v230 = vld [vmem:[%s215] sm:$0xff]
      %v231 = vsub.f32 %v229, %v230
      %v232 = vmul.f32 %v231, %v231
      %v233 = vld [vmem:[%s223] sm:$0xff]
      %v234 = vadd.f32 %v232, 0.0
      %v235 = vadd.f32 %v233, %v234
      %236 = vst [vmem:[%s223] sm:$0xff] %v235
      %p237 = scmp.lt.s32.totalorder %s17, 0
      %s238 = scalar_select %p237, %s17, 0
      %s239 = smul.addr %s238, 8
      %s240 = scalar_lea.vmem %s2, %s239
      // Predicated region
      $region33: #{multi_scale_criterion.3} parent=27 // pred_check
        %p241 = pneg %p111
      $region34: #{multi_scale_criterion.3} parent=27 // pred_check_branch
        %243 = sbr.rel (%p241) target = $region36
      $region35: #{multi_scale_criterion.3} parent=27 // pred_region
        _
      $region36: #{multi_scale_criterion.3} parent=27 // pred_fallthru
        _
      // Predicated region
      $region37: #{multi_scale_criterion.3} parent=27 // pred_check
        %p244 = pneg %p111
      $region38: #{multi_scale_criterion.3} parent=27 // pred_check_branch
        %246 = sbr.rel (%p244) target = $region40
      $region39: #{multi_scale_criterion.3} parent=27 // pred_region
        %p247 = scmp.lt.s32.totalorder %s17, 0
        %s248 = scalar_select %p247, %s17, 0
        %s249 = smul.addr %s248, 8
        %s250 = scalar_lea.vmem %s2, %s249
      $region40: #{multi_scale_criterion.3} parent=27 // pred_fallthru
        _
    $region28: #{multi_scale_criterion.3} parent=5 // pred_fallthru
      _
    %p251 = scmp.le.s32.totalorder 2, %s8
    // Predicated region
    $region41: #{multi_scale_criterion.3} parent=5 // pred_check
      %p252 = pneg %p251
    $region42: #{multi_scale_criterion.3} parent=5 // pred_check_branch
      %254 = sbr.rel (%p252) target = $region44
    $region43: #{multi_scale_criterion.3} parent=5 // pred_region
      %s255 = ssub.s32 %s8, 2
    $region44: #{multi_scale_criterion.3} parent=5 // pred_fallthru
      _
  $region6: #{multi_scale_criterion.3} parent=0 // loop_footer
    %s12 = sadd.s32 1, %s8
  $region7: #{multi_scale_criterion.3} parent=0 // loop_footer_branch
    %7 = sbr.rel target = $region3
  $region8: #{multi_scale_criterion.3} parent=0 // loop_exit
    _

</llo_original>
